<compile_context>
chip_gen: v6e
topology: v6e:2x2x1
jax: 0.10.0
libtpu: 0.0.40
codegen_flags: <defaults>
</compile_context>

<pallas_src>
import functools

import jax
import jax.numpy as jnp
from jax import lax
from jax.experimental import pallas as pl
from jax.experimental.pallas import tpu as pltpu


def _center_loss_kernel(labels_ref,      # SMEM (B_pad,) int32 (scalar prefetch)
                        x_ref,           # VMEM (tile_b, D) block
                        centers_hbm,     # HBM (C, D) raw ref
                        out_ref,         # SMEM (1, 1) f32
                        acc_ref,         # VMEM (tile_b, 1) f32 scratch
                        c_buf,           # VMEM (2, tile_b, D) scratch
                        sem,             # DMA sems (2, tile_b)
                        *, true_batch, num_classes, tile_b):
    b = pl.program_id(0)
    nb = pl.num_programs(0)
    slot = b % 2

    def start_gather(tile_idx, s):
        # One row DMA per batch row: centers[labels[i]] -> c_buf[s, r].
        for r in range(tile_b):
            lbl = labels_ref[tile_idx * tile_b + r]
            pltpu.make_async_copy(
                centers_hbm.at[pl.ds(lbl, 1)],
                c_buf.at[s, pl.ds(r, 1)],
                sem.at[s, r],
            ).start()

    def wait_gather(s):
        for r in range(tile_b):
            pltpu.make_async_copy(
                centers_hbm.at[pl.ds(0, 1)],
                c_buf.at[s, pl.ds(r, 1)],
                sem.at[s, r],
            ).wait()

    @pl.when(b == 0)
    def _():
        acc_ref[...] = jnp.zeros_like(acc_ref)
        start_gather(0, 0)

    # Prefetch next tile's centers while this tile's DMAs land / compute runs.
    @pl.when(b + 1 < nb)
    def _():
        start_gather(b + 1, 1 - slot)

    wait_gather(slot)

    x = x_ref[...].astype(jnp.float32)            # (tile_b, D)
    c = c_buf[slot].astype(jnp.float32)           # (tile_b, D)
    diff = x - c
    d = jnp.sum(diff * diff, axis=1, keepdims=True)   # (tile_b, 1)
    # torch clamps AFTER masking: matched entries clamp to [1e-12, 1e12].
    d = jnp.clip(d, 1e-12, 1e12)
    # Zero out padded batch rows.
    row = b * tile_b + lax.broadcasted_iota(jnp.int32, (tile_b, 1), 0)
    d = jnp.where(row < true_batch, d, 0.0)
    acc_ref[...] += d

    @pl.when(b == nb - 1)
    def _():
        # (C-1) masked-out entries per row each clamp to exactly 1e-12.
        const = (num_classes - 1) * 1e-12
        out_ref[0, 0] = jnp.sum(acc_ref[...]) / true_batch + const


def center_loss(x, centers, labels):
    """x: (B, D), centers: (C, D), labels: (B,) int -> scalar f32 loss."""
    B, D = x.shape
    C, D2 = centers.shape
    assert D == D2

    # Batch tile: multiple of 8 sublanes, capped to keep the DMA unroll small.
    tile_b = max(8, min(32, ((B + 7) // 8) * 8))
    nb = -(-B // tile_b)
    b_pad = nb * tile_b

    labels_p = labels.astype(jnp.int32)
    x_p = x
    if b_pad != B:
        x_p = jnp.pad(x, ((0, b_pad - B), (0, 0)))
        labels_p = jnp.pad(labels_p, (0, b_pad - B))

    kernel = functools.partial(
        _center_loss_kernel, true_batch=B, num_classes=C, tile_b=tile_b)

    grid_spec = pltpu.PrefetchScalarGridSpec(
        num_scalar_prefetch=1,
        grid=(nb,),
        in_specs=[
            pl.BlockSpec((tile_b, D), lambda b, labels: (b, 0)),   # x tiles
            pl.BlockSpec(memory_space=pl.ANY),                     # centers stay in HBM
        ],
        out_specs=pl.BlockSpec(memory_space=pltpu.SMEM),
        scratch_shapes=[
            pltpu.VMEM((tile_b, 1), jnp.float32),        # loss accumulator
            pltpu.VMEM((2, tile_b, D), centers.dtype),   # double-buffered gather
            pltpu.SemaphoreType.DMA((2, tile_b)),
        ],
    )

    out = pl.pallas_call(
        kernel,
        out_shape=jax.ShapeDtypeStruct((1, 1), jnp.float32),
        grid_spec=grid_spec,
        compiler_params=pltpu.CompilerParams(
            dimension_semantics=("arbitrary",)),
    )(labels_p, x_p, centers)
    return out[0, 0]


def center_loss_ref(x, centers, labels):
    """Pure-JAX reference that mirrors the torch module exactly."""
    B = x.shape[0]
    C = centers.shape[0]
    distmat = (
        jnp.sum(x * x, axis=1, keepdims=True)
        + jnp.sum(centers * centers, axis=1, keepdims=True).T
        - 2.0 * jnp.dot(x, centers.T, precision=lax.Precision.HIGHEST)
    )
    mask = (labels[:, None] == jnp.arange(C)[None, :]).astype(jnp.float32)
    dist = jnp.clip(distmat * mask, 1e-12, 1e12)
    return jnp.sum(dist) / B


if __name__ == "__main__":
    # Small, TPU-friendly shapes: B=8, feat_dim=128, num_classes=96
    batch, feat_dim, num_classes = 8, 128, 96

    key = jax.random.PRNGKey(0)
    kx, kc, kl = jax.random.split(key, 3)

    x = jax.random.normal(kx, (batch, feat_dim), dtype=jnp.float32)
    # deterministic "parameter" init mirroring torch.randn(num_classes, feat_dim)
    centers = jax.random.normal(kc, (num_classes, feat_dim), dtype=jnp.float32)
    labels = jax.random.randint(kl, (batch,), 0, num_classes, dtype=jnp.int32)

    loss = center_loss(x, centers, labels)
    jax.block_until_ready(loss)

    ref = center_loss_ref(x, centers, labels)
    assert jnp.allclose(loss, ref, rtol=1e-4, atol=1e-4), (loss, ref)

    print("KERNEL_OK")
</pallas_src>

<mosaic_0001>
module attributes {stable_mosaic.version = 11 : i64} {
  func.func @_center_loss_kernel(%arg0: i32, %arg1: memref<8xi32, #tpu.memory_space<smem>>, %arg2: memref<8x128xf32, #tpu.memory_space<vmem>>, %arg3: memref<96x128xf32, #tpu.memory_space<any>>, %arg4: memref<1x1xf32, #tpu.memory_space<smem>>, %arg5: memref<8x1xf32, #tpu.memory_space<vmem>>, %arg6: memref<2x8x128xf32, #tpu.memory_space<vmem>>, %arg7: memref<2x8x!tpu.dma_semaphore, #tpu.memory_space<semaphore_mem>>) attributes {dimension_semantics = [#tpu.dimension_semantics<arbitrary>], iteration_bounds = array<i64: 1>, scalar_prefetch = 1 : i64, scratch_operands = 3 : i64, tpu.core_type = #tpu.core_type<tc>, window_params = [{transform_indices = @transform_0, window_bounds = array<i64: 8, 128>}, {}, {transform_indices = @transform_2, window_bounds = array<i64: 1, 1>}]} {
    %c2_i32 = arith.constant 2 : i32
    %c0_i32 = arith.constant 0 : i32
    %0 = arith.cmpi eq, %c2_i32, %c0_i32 : i32
    %c1_i32 = arith.constant 1 : i32
    %1 = arith.select %0, %c1_i32, %c2_i32 : i32
    %2 = arith.remsi %arg0, %1 : i32
    %c0_i32_0 = arith.constant 0 : i32
    %3 = arith.cmpi ne, %2, %c0_i32_0 : i32
    %c0_i32_1 = arith.constant 0 : i32
    %4 = arith.cmpi slt, %2, %c0_i32_1 : i32
    %c0_i32_2 = arith.constant 0 : i32
    %5 = arith.cmpi slt, %1, %c0_i32_2 : i32
    %6 = arith.xori %4, %5 : i1
    %7 = arith.andi %6, %3 : i1
    %8 = arith.addi %2, %1 : i32
    %9 = arith.select %7, %8, %2 : i32
    %c0_i32_3 = arith.constant 0 : i32
    %10 = arith.cmpi eq, %arg0, %c0_i32_3 : i32
    %11 = arith.extui %10 : i1 to i32
    %c0_i32_4 = arith.constant 0 : i32
    %12 = arith.cmpi ne, %11, %c0_i32_4 : i32
    scf.if %12 {
      %cst_56 = arith.constant 0.000000e+00 : f32
      %83 = vector.broadcast %cst_56 : f32 to vector<8x1xf32>
      %c0_57 = arith.constant 0 : index
      %c0_58 = arith.constant 0 : index
      %84 = vector.load %arg5[%c0_57, %c0_58] : memref<8x1xf32, #tpu.memory_space<vmem>>, vector<8x1xf32>
      tpu.vector_store %arg5[%c0_57, %c0_58], %83 {strides = array<i32>} : memref<8x1xf32, #tpu.memory_space<vmem>>, vector<8x1xf32>,
      %c0_59 = arith.constant 0 : index
      %85 = memref.load %arg1[%c0_59] : memref<8xi32, #tpu.memory_space<smem>>
      %c0_i32_60 = arith.constant 0 : i32
      %c0_i32_61 = arith.constant 0 : i32
      %c0_i32_62 = arith.constant 0 : i32
      %c0_i32_63 = arith.constant 0 : i32
      %86 = tpu.memref_slice %arg3[%85, %c0_i32_63] : memref<96x128xf32, #tpu.memory_space<any>> -> memref<1x128xf32, #tpu.memory_space<any>>
      %c0_i32_64 = arith.constant 0 : i32
      %c0_i32_65 = arith.constant 0 : i32
      %87 = tpu.memref_slice %arg6[%c0_i32_60, %c0_i32_64, %c0_i32_65] : memref<2x8x128xf32, #tpu.memory_space<vmem>> -> memref<1x1x128xf32, #tpu.memory_space<vmem>>
      %88 = tpu.memref_squeeze %87 : memref<1x1x128xf32, #tpu.memory_space<vmem>> -> memref<1x128xf32, #tpu.memory_space<vmem>>
      %89 = tpu.memref_slice %arg7[%c0_i32_61, %c0_i32_62] : memref<2x8x!tpu.dma_semaphore, #tpu.memory_space<semaphore_mem>> -> memref<1x1x!tpu.dma_semaphore, #tpu.memory_space<semaphore_mem>>
      %90 = tpu.memref_squeeze %89 : memref<1x1x!tpu.dma_semaphore, #tpu.memory_space<semaphore_mem>> -> memref<!tpu.dma_semaphore, #tpu.memory_space<semaphore_mem>>
      tpu.enqueue_dma source(%86 : memref<1x128xf32, #tpu.memory_space<any>>) target(%88 : memref<1x128xf32, #tpu.memory_space<vmem>>) target_semaphore(%90 : memref<!tpu.dma_semaphore, #tpu.memory_space<semaphore_mem>>)
      %c1 = arith.constant 1 : index
      %91 = memref.load %arg1[%c1] : memref<8xi32, #tpu.memory_space<smem>>
      %c0_i32_66 = arith.constant 0 : i32
      %c0_i32_67 = arith.constant 0 : i32
      %c1_i32_68 = arith.constant 1 : i32
      %c0_i32_69 = arith.constant 0 : i32
      %92 = tpu.memref_slice %arg3[%91, %c0_i32_69] : memref<96x128xf32, #tpu.memory_space<any>> -> memref<1x128xf32, #tpu.memory_space<any>>
      %c1_i32_70 = arith.constant 1 : i32
      %c0_i32_71 = arith.constant 0 : i32
      %93 = tpu.memref_slice %arg6[%c0_i32_66, %c1_i32_70, %c0_i32_71] : memref<2x8x128xf32, #tpu.memory_space<vmem>> -> memref<1x1x128xf32, #tpu.memory_space<vmem>>
      %94 = tpu.memref_squeeze %93 : memref<1x1x128xf32, #tpu.memory_space<vmem>> -> memref<1x128xf32, #tpu.memory_space<vmem>>
      %95 = tpu.memref_slice %arg7[%c0_i32_67, %c1_i32_68] : memref<2x8x!tpu.dma_semaphore, #tpu.memory_space<semaphore_mem>> -> memref<1x1x!tpu.dma_semaphore, #tpu.memory_space<semaphore_mem>>
      %96 = tpu.memref_squeeze %95 : memref<1x1x!tpu.dma_semaphore, #tpu.memory_space<semaphore_mem>> -> memref<!tpu.dma_semaphore, #tpu.memory_space<semaphore_mem>>
      tpu.enqueue_dma source(%92 : memref<1x128xf32, #tpu.memory_space<any>>) target(%94 : memref<1x128xf32, #tpu.memory_space<vmem>>) target_semaphore(%96 : memref<!tpu.dma_semaphore, #tpu.memory_space<semaphore_mem>>)
      %c2 = arith.constant 2 : index
      %97 = memref.load %arg1[%c2] : memref<8xi32, #tpu.memory_space<smem>>
      %c0_i32_72 = arith.constant 0 : i32
      %c0_i32_73 = arith.constant 0 : i32
      %c2_i32_74 = arith.constant 2 : i32
      %c0_i32_75 = arith.constant 0 : i32
      %98 = tpu.memref_slice %arg3[%97, %c0_i32_75] : memref<96x128xf32, #tpu.memory_space<any>> -> memref<1x128xf32, #tpu.memory_space<any>>
      %c2_i32_76 = arith.constant 2 : i32
      %c0_i32_77 = arith.constant 0 : i32
      %99 = tpu.memref_slice %arg6[%c0_i32_72, %c2_i32_76, %c0_i32_77] : memref<2x8x128xf32, #tpu.memory_space<vmem>> -> memref<1x1x128xf32, #tpu.memory_space<vmem>>
      %100 = tpu.memref_squeeze %99 : memref<1x1x128xf32, #tpu.memory_space<vmem>> -> memref<1x128xf32, #tpu.memory_space<vmem>>
      %101 = tpu.memref_slice %arg7[%c0_i32_73, %c2_i32_74] : memref<2x8x!tpu.dma_semaphore, #tpu.memory_space<semaphore_mem>> -> memref<1x1x!tpu.dma_semaphore, #tpu.memory_space<semaphore_mem>>
      %102 = tpu.memref_squeeze %101 : memref<1x1x!tpu.dma_semaphore, #tpu.memory_space<semaphore_mem>> -> memref<!tpu.dma_semaphore, #tpu.memory_space<semaphore_mem>>
      tpu.enqueue_dma source(%98 : memref<1x128xf32, #tpu.memory_space<any>>) target(%100 : memref<1x128xf32, #tpu.memory_space<vmem>>) target_semaphore(%102 : memref<!tpu.dma_semaphore, #tpu.memory_space<semaphore_mem>>)
      %c3 = arith.constant 3 : index
      %103 = memref.load %arg1[%c3] : memref<8xi32, #tpu.memory_space<smem>>
      %c0_i32_78 = arith.constant 0 : i32
      %c0_i32_79 = arith.constant 0 : i32
      %c3_i32_80 = arith.constant 3 : i32
      %c0_i32_81 = arith.constant 0 : i32
      %104 = tpu.memref_slice %arg3[%103, %c0_i32_81] : memref<96x128xf32, #tpu.memory_space<any>> -> memref<1x128xf32, #tpu.memory_space<any>>
      %c3_i32_82 = arith.constant 3 : i32
      %c0_i32_83 = arith.constant 0 : i32
      %105 = tpu.memref_slice %arg6[%c0_i32_78, %c3_i32_82, %c0_i32_83] : memref<2x8x128xf32, #tpu.memory_space<vmem>> -> memref<1x1x128xf32, #tpu.memory_space<vmem>>
      %106 = tpu.memref_squeeze %105 : memref<1x1x128xf32, #tpu.memory_space<vmem>> -> memref<1x128xf32, #tpu.memory_space<vmem>>
      %107 = tpu.memref_slice %arg7[%c0_i32_79, %c3_i32_80] : memref<2x8x!tpu.dma_semaphore, #tpu.memory_space<semaphore_mem>> -> memref<1x1x!tpu.dma_semaphore, #tpu.memory_space<semaphore_mem>>
      %108 = tpu.memref_squeeze %107 : memref<1x1x!tpu.dma_semaphore, #tpu.memory_space<semaphore_mem>> -> memref<!tpu.dma_semaphore, #tpu.memory_space<semaphore_mem>>
      tpu.enqueue_dma source(%104 : memref<1x128xf32, #tpu.memory_space<any>>) target(%106 : memref<1x128xf32, #tpu.memory_space<vmem>>) target_semaphore(%108 : memref<!tpu.dma_semaphore, #tpu.memory_space<semaphore_mem>>)
      %c4 = arith.constant 4 : index
      %109 = memref.load %arg1[%c4] : memref<8xi32, #tpu.memory_space<smem>>
      %c0_i32_84 = arith.constant 0 : i32
      %c0_i32_85 = arith.constant 0 : i32
      %c4_i32_86 = arith.constant 4 : i32
      %c0_i32_87 = arith.constant 0 : i32
      %110 = tpu.memref_slice %arg3[%109, %c0_i32_87] : memref<96x128xf32, #tpu.memory_space<any>> -> memref<1x128xf32, #tpu.memory_space<any>>
      %c4_i32_88 = arith.constant 4 : i32
      %c0_i32_89 = arith.constant 0 : i32
      %111 = tpu.memref_slice %arg6[%c0_i32_84, %c4_i32_88, %c0_i32_89] : memref<2x8x128xf32, #tpu.memory_space<vmem>> -> memref<1x1x128xf32, #tpu.memory_space<vmem>>
      %112 = tpu.memref_squeeze %111 : memref<1x1x128xf32, #tpu.memory_space<vmem>> -> memref<1x128xf32, #tpu.memory_space<vmem>>
      %113 = tpu.memref_slice %arg7[%c0_i32_85, %c4_i32_86] : memref<2x8x!tpu.dma_semaphore, #tpu.memory_space<semaphore_mem>> -> memref<1x1x!tpu.dma_semaphore, #tpu.memory_space<semaphore_mem>>
      %114 = tpu.memref_squeeze %113 : memref<1x1x!tpu.dma_semaphore, #tpu.memory_space<semaphore_mem>> -> memref<!tpu.dma_semaphore, #tpu.memory_space<semaphore_mem>>
      tpu.enqueue_dma source(%110 : memref<1x128xf32, #tpu.memory_space<any>>) target(%112 : memref<1x128xf32, #tpu.memory_space<vmem>>) target_semaphore(%114 : memref<!tpu.dma_semaphore, #tpu.memory_space<semaphore_mem>>)
      %c5 = arith.constant 5 : index
      %115 = memref.load %arg1[%c5] : memref<8xi32, #tpu.memory_space<smem>>
      %c0_i32_90 = arith.constant 0 : i32
      %c0_i32_91 = arith.constant 0 : i32
      %c5_i32_92 = arith.constant 5 : i32
      %c0_i32_93 = arith.constant 0 : i32
      %116 = tpu.memref_slice %arg3[%115, %c0_i32_93] : memref<96x128xf32, #tpu.memory_space<any>> -> memref<1x128xf32, #tpu.memory_space<any>>
      %c5_i32_94 = arith.constant 5 : i32
      %c0_i32_95 = arith.constant 0 : i32
      %117 = tpu.memref_slice %arg6[%c0_i32_90, %c5_i32_94, %c0_i32_95] : memref<2x8x128xf32, #tpu.memory_space<vmem>> -> memref<1x1x128xf32, #tpu.memory_space<vmem>>
      %118 = tpu.memref_squeeze %117 : memref<1x1x128xf32, #tpu.memory_space<vmem>> -> memref<1x128xf32, #tpu.memory_space<vmem>>
      %119 = tpu.memref_slice %arg7[%c0_i32_91, %c5_i32_92] : memref<2x8x!tpu.dma_semaphore, #tpu.memory_space<semaphore_mem>> -> memref<1x1x!tpu.dma_semaphore, #tpu.memory_space<semaphore_mem>>
      %120 = tpu.memref_squeeze %119 : memref<1x1x!tpu.dma_semaphore, #tpu.memory_space<semaphore_mem>> -> memref<!tpu.dma_semaphore, #tpu.memory_space<semaphore_mem>>
      tpu.enqueue_dma source(%116 : memref<1x128xf32, #tpu.memory_space<any>>) target(%118 : memref<1x128xf32, #tpu.memory_space<vmem>>) target_semaphore(%120 : memref<!tpu.dma_semaphore, #tpu.memory_space<semaphore_mem>>)
      %c6 = arith.constant 6 : index
      %121 = memref.load %arg1[%c6] : memref<8xi32, #tpu.memory_space<smem>>
      %c0_i32_96 = arith.constant 0 : i32
      %c0_i32_97 = arith.constant 0 : i32
      %c6_i32_98 = arith.constant 6 : i32
      %c0_i32_99 = arith.constant 0 : i32
      %122 = tpu.memref_slice %arg3[%121, %c0_i32_99] : memref<96x128xf32, #tpu.memory_space<any>> -> memref<1x128xf32, #tpu.memory_space<any>>
      %c6_i32_100 = arith.constant 6 : i32
      %c0_i32_101 = arith.constant 0 : i32
      %123 = tpu.memref_slice %arg6[%c0_i32_96, %c6_i32_100, %c0_i32_101] : memref<2x8x128xf32, #tpu.memory_space<vmem>> -> memref<1x1x128xf32, #tpu.memory_space<vmem>>
      %124 = tpu.memref_squeeze %123 : memref<1x1x128xf32, #tpu.memory_space<vmem>> -> memref<1x128xf32, #tpu.memory_space<vmem>>
      %125 = tpu.memref_slice %arg7[%c0_i32_97, %c6_i32_98] : memref<2x8x!tpu.dma_semaphore, #tpu.memory_space<semaphore_mem>> -> memref<1x1x!tpu.dma_semaphore, #tpu.memory_space<semaphore_mem>>
      %126 = tpu.memref_squeeze %125 : memref<1x1x!tpu.dma_semaphore, #tpu.memory_space<semaphore_mem>> -> memref<!tpu.dma_semaphore, #tpu.memory_space<semaphore_mem>>
      tpu.enqueue_dma source(%122 : memref<1x128xf32, #tpu.memory_space<any>>) target(%124 : memref<1x128xf32, #tpu.memory_space<vmem>>) target_semaphore(%126 : memref<!tpu.dma_semaphore, #tpu.memory_space<semaphore_mem>>)
      %c7 = arith.constant 7 : index
      %127 = memref.load %arg1[%c7] : memref<8xi32, #tpu.memory_space<smem>>
      %c0_i32_102 = arith.constant 0 : i32
      %c0_i32_103 = arith.constant 0 : i32
      %c7_i32_104 = arith.constant 7 : i32
      %c0_i32_105 = arith.constant 0 : i32
      %128 = tpu.memref_slice %arg3[%127, %c0_i32_105] : memref<96x128xf32, #tpu.memory_space<any>> -> memref<1x128xf32, #tpu.memory_space<any>>
      %c7_i32_106 = arith.constant 7 : i32
      %c0_i32_107 = arith.constant 0 : i32
      %129 = tpu.memref_slice %arg6[%c0_i32_102, %c7_i32_106, %c0_i32_107] : memref<2x8x128xf32, #tpu.memory_space<vmem>> -> memref<1x1x128xf32, #tpu.memory_space<vmem>>
      %130 = tpu.memref_squeeze %129 : memref<1x1x128xf32, #tpu.memory_space<vmem>> -> memref<1x128xf32, #tpu.memory_space<vmem>>
      %131 = tpu.memref_slice %arg7[%c0_i32_103, %c7_i32_104] : memref<2x8x!tpu.dma_semaphore, #tpu.memory_space<semaphore_mem>> -> memref<1x1x!tpu.dma_semaphore, #tpu.memory_space<semaphore_mem>>
      %132 = tpu.memref_squeeze %131 : memref<1x1x!tpu.dma_semaphore, #tpu.memory_space<semaphore_mem>> -> memref<!tpu.dma_semaphore, #tpu.memory_space<semaphore_mem>>
      tpu.enqueue_dma source(%128 : memref<1x128xf32, #tpu.memory_space<any>>) target(%130 : memref<1x128xf32, #tpu.memory_space<vmem>>) target_semaphore(%132 : memref<!tpu.dma_semaphore, #tpu.memory_space<semaphore_mem>>)
    } else {
    }
    %c1_i32_5 = arith.constant 1 : i32
    %13 = arith.addi %arg0, %c1_i32_5 : i32
    %c1_i32_6 = arith.constant 1 : i32
    %14 = arith.cmpi slt, %13, %c1_i32_6 : i32
    %15 = arith.extui %14 : i1 to i32
    %c0_i32_7 = arith.constant 0 : i32
    %16 = arith.cmpi ne, %15, %c0_i32_7 : i32
    scf.if %16 {
      %c1_i32_56 = arith.constant 1 : i32
      %83 = arith.addi %arg0, %c1_i32_56 : i32
      %c1_i32_57 = arith.constant 1 : i32
      %84 = arith.subi %c1_i32_57, %9 : i32
      %c8_i32_58 = arith.constant 8 : i32
      %85 = arith.muli %83, %c8_i32_58 : i32
      %c0_i32_59 = arith.constant 0 : i32
      %86 = arith.addi %85, %c0_i32_59 : i32
      %87 = arith.index_cast %86 : i32 to index
      %88 = memref.load %arg1[%87] : memref<8xi32, #tpu.memory_space<smem>>
      %c0_i32_60 = arith.constant 0 : i32
      %c0_i32_61 = arith.constant 0 : i32
      %89 = tpu.memref_slice %arg3[%88, %c0_i32_61] : memref<96x128xf32, #tpu.memory_space<any>> -> memref<1x128xf32, #tpu.memory_space<any>>
      %c0_i32_62 = arith.constant 0 : i32
      %c0_i32_63 = arith.constant 0 : i32
      %90 = tpu.memref_slice %arg6[%84, %c0_i32_62, %c0_i32_63] : memref<2x8x128xf32, #tpu.memory_space<vmem>> -> memref<1x1x128xf32, #tpu.memory_space<vmem>>
      %91 = tpu.memref_squeeze %90 : memref<1x1x128xf32, #tpu.memory_space<vmem>> -> memref<1x128xf32, #tpu.memory_space<vmem>>
      %92 = tpu.memref_slice %arg7[%84, %c0_i32_60] : memref<2x8x!tpu.dma_semaphore, #tpu.memory_space<semaphore_mem>> -> memref<1x1x!tpu.dma_semaphore, #tpu.memory_space<semaphore_mem>>
      %93 = tpu.memref_squeeze %92 : memref<1x1x!tpu.dma_semaphore, #tpu.memory_space<semaphore_mem>> -> memref<!tpu.dma_semaphore, #tpu.memory_space<semaphore_mem>>
      tpu.enqueue_dma source(%89 : memref<1x128xf32, #tpu.memory_space<any>>) target(%91 : memref<1x128xf32, #tpu.memory_space<vmem>>) target_semaphore(%93 : memref<!tpu.dma_semaphore, #tpu.memory_space<semaphore_mem>>)
      %c8_i32_64 = arith.constant 8 : i32
      %94 = arith.muli %83, %c8_i32_64 : i32
      %c1_i32_65 = arith.constant 1 : i32
      %95 = arith.addi %94, %c1_i32_65 : i32
      %96 = arith.index_cast %95 : i32 to index
      %97 = memref.load %arg1[%96] : memref<8xi32, #tpu.memory_space<smem>>
      %c1_i32_66 = arith.constant 1 : i32
      %c0_i32_67 = arith.constant 0 : i32
      %98 = tpu.memref_slice %arg3[%97, %c0_i32_67] : memref<96x128xf32, #tpu.memory_space<any>> -> memref<1x128xf32, #tpu.memory_space<any>>
      %c1_i32_68 = arith.constant 1 : i32
      %c0_i32_69 = arith.constant 0 : i32
      %99 = tpu.memref_slice %arg6[%84, %c1_i32_68, %c0_i32_69] : memref<2x8x128xf32, #tpu.memory_space<vmem>> -> memref<1x1x128xf32, #tpu.memory_space<vmem>>
      %100 = tpu.memref_squeeze %99 : memref<1x1x128xf32, #tpu.memory_space<vmem>> -> memref<1x128xf32, #tpu.memory_space<vmem>>
      %101 = tpu.memref_slice %arg7[%84, %c1_i32_66] : memref<2x8x!tpu.dma_semaphore, #tpu.memory_space<semaphore_mem>> -> memref<1x1x!tpu.dma_semaphore, #tpu.memory_space<semaphore_mem>>
      %102 = tpu.memref_squeeze %101 : memref<1x1x!tpu.dma_semaphore, #tpu.memory_space<semaphore_mem>> -> memref<!tpu.dma_semaphore, #tpu.memory_space<semaphore_mem>>
      tpu.enqueue_dma source(%98 : memref<1x128xf32, #tpu.memory_space<any>>) target(%100 : memref<1x128xf32, #tpu.memory_space<vmem>>) target_semaphore(%102 : memref<!tpu.dma_semaphore, #tpu.memory_space<semaphore_mem>>)
      %c8_i32_70 = arith.constant 8 : i32
      %103 = arith.muli %83, %c8_i32_70 : i32
      %c2_i32_71 = arith.constant 2 : i32
      %104 = arith.addi %103, %c2_i32_71 : i32
      %105 = arith.index_cast %104 : i32 to index
      %106 = memref.load %arg1[%105] : memref<8xi32, #tpu.memory_space<smem>>
      %c2_i32_72 = arith.constant 2 : i32
      %c0_i32_73 = arith.constant 0 : i32
      %107 = tpu.memref_slice %arg3[%106, %c0_i32_73] : memref<96x128xf32, #tpu.memory_space<any>> -> memref<1x128xf32, #tpu.memory_space<any>>
      %c2_i32_74 = arith.constant 2 : i32
      %c0_i32_75 = arith.constant 0 : i32
      %108 = tpu.memref_slice %arg6[%84, %c2_i32_74, %c0_i32_75] : memref<2x8x128xf32, #tpu.memory_space<vmem>> -> memref<1x1x128xf32, #tpu.memory_space<vmem>>
      %109 = tpu.memref_squeeze %108 : memref<1x1x128xf32, #tpu.memory_space<vmem>> -> memref<1x128xf32, #tpu.memory_space<vmem>>
      %110 = tpu.memref_slice %arg7[%84, %c2_i32_72] : memref<2x8x!tpu.dma_semaphore, #tpu.memory_space<semaphore_mem>> -> memref<1x1x!tpu.dma_semaphore, #tpu.memory_space<semaphore_mem>>
      %111 = tpu.memref_squeeze %110 : memref<1x1x!tpu.dma_semaphore, #tpu.memory_space<semaphore_mem>> -> memref<!tpu.dma_semaphore, #tpu.memory_space<semaphore_mem>>
      tpu.enqueue_dma source(%107 : memref<1x128xf32, #tpu.memory_space<any>>) target(%109 : memref<1x128xf32, #tpu.memory_space<vmem>>) target_semaphore(%111 : memref<!tpu.dma_semaphore, #tpu.memory_space<semaphore_mem>>)
      %c8_i32_76 = arith.constant 8 : i32
      %112 = arith.muli %83, %c8_i32_76 : i32
      %c3_i32_77 = arith.constant 3 : i32
      %113 = arith.addi %112, %c3_i32_77 : i32
      %114 = arith.index_cast %113 : i32 to index
      %115 = memref.load %arg1[%114] : memref<8xi32, #tpu.memory_space<smem>>
      %c3_i32_78 = arith.constant 3 : i32
      %c0_i32_79 = arith.constant 0 : i32
      %116 = tpu.memref_slice %arg3[%115, %c0_i32_79] : memref<96x128xf32, #tpu.memory_space<any>> -> memref<1x128xf32, #tpu.memory_space<any>>
      %c3_i32_80 = arith.constant 3 : i32
      %c0_i32_81 = arith.constant 0 : i32
      %117 = tpu.memref_slice %arg6[%84, %c3_i32_80, %c0_i32_81] : memref<2x8x128xf32, #tpu.memory_space<vmem>> -> memref<1x1x128xf32, #tpu.memory_space<vmem>>
      %118 = tpu.memref_squeeze %117 : memref<1x1x128xf32, #tpu.memory_space<vmem>> -> memref<1x128xf32, #tpu.memory_space<vmem>>
      %119 = tpu.memref_slice %arg7[%84, %c3_i32_78] : memref<2x8x!tpu.dma_semaphore, #tpu.memory_space<semaphore_mem>> -> memref<1x1x!tpu.dma_semaphore, #tpu.memory_space<semaphore_mem>>
      %120 = tpu.memref_squeeze %119 : memref<1x1x!tpu.dma_semaphore, #tpu.memory_space<semaphore_mem>> -> memref<!tpu.dma_semaphore, #tpu.memory_space<semaphore_mem>>
      tpu.enqueue_dma source(%116 : memref<1x128xf32, #tpu.memory_space<any>>) target(%118 : memref<1x128xf32, #tpu.memory_space<vmem>>) target_semaphore(%120 : memref<!tpu.dma_semaphore, #tpu.memory_space<semaphore_mem>>)
      %c8_i32_82 = arith.constant 8 : i32
      %121 = arith.muli %83, %c8_i32_82 : i32
      %c4_i32_83 = arith.constant 4 : i32
      %122 = arith.addi %121, %c4_i32_83 : i32
      %123 = arith.index_cast %122 : i32 to index
      %124 = memref.load %arg1[%123] : memref<8xi32, #tpu.memory_space<smem>>
      %c4_i32_84 = arith.constant 4 : i32
      %c0_i32_85 = arith.constant 0 : i32
      %125 = tpu.memref_slice %arg3[%124, %c0_i32_85] : memref<96x128xf32, #tpu.memory_space<any>> -> memref<1x128xf32, #tpu.memory_space<any>>
      %c4_i32_86 = arith.constant 4 : i32
      %c0_i32_87 = arith.constant 0 : i32
      %126 = tpu.memref_slice %arg6[%84, %c4_i32_86, %c0_i32_87] : memref<2x8x128xf32, #tpu.memory_space<vmem>> -> memref<1x1x128xf32, #tpu.memory_space<vmem>>
      %127 = tpu.memref_squeeze %126 : memref<1x1x128xf32, #tpu.memory_space<vmem>> -> memref<1x128xf32, #tpu.memory_space<vmem>>
      %128 = tpu.memref_slice %arg7[%84, %c4_i32_84] : memref<2x8x!tpu.dma_semaphore, #tpu.memory_space<semaphore_mem>> -> memref<1x1x!tpu.dma_semaphore, #tpu.memory_space<semaphore_mem>>
      %129 = tpu.memref_squeeze %128 : memref<1x1x!tpu.dma_semaphore, #tpu.memory_space<semaphore_mem>> -> memref<!tpu.dma_semaphore, #tpu.memory_space<semaphore_mem>>
      tpu.enqueue_dma source(%125 : memref<1x128xf32, #tpu.memory_space<any>>) target(%127 : memref<1x128xf32, #tpu.memory_space<vmem>>) target_semaphore(%129 : memref<!tpu.dma_semaphore, #tpu.memory_space<semaphore_mem>>)
      %c8_i32_88 = arith.constant 8 : i32
      %130 = arith.muli %83, %c8_i32_88 : i32
      %c5_i32_89 = arith.constant 5 : i32
      %131 = arith.addi %130, %c5_i32_89 : i32
      %132 = arith.index_cast %131 : i32 to index
      %133 = memref.load %arg1[%132] : memref<8xi32, #tpu.memory_space<smem>>
      %c5_i32_90 = arith.constant 5 : i32
      %c0_i32_91 = arith.constant 0 : i32
      %134 = tpu.memref_slice %arg3[%133, %c0_i32_91] : memref<96x128xf32, #tpu.memory_space<any>> -> memref<1x128xf32, #tpu.memory_space<any>>
      %c5_i32_92 = arith.constant 5 : i32
      %c0_i32_93 = arith.constant 0 : i32
      %135 = tpu.memref_slice %arg6[%84, %c5_i32_92, %c0_i32_93] : memref<2x8x128xf32, #tpu.memory_space<vmem>> -> memref<1x1x128xf32, #tpu.memory_space<vmem>>
      %136 = tpu.memref_squeeze %135 : memref<1x1x128xf32, #tpu.memory_space<vmem>> -> memref<1x128xf32, #tpu.memory_space<vmem>>
      %137 = tpu.memref_slice %arg7[%84, %c5_i32_90] : memref<2x8x!tpu.dma_semaphore, #tpu.memory_space<semaphore_mem>> -> memref<1x1x!tpu.dma_semaphore, #tpu.memory_space<semaphore_mem>>
      %138 = tpu.memref_squeeze %137 : memref<1x1x!tpu.dma_semaphore, #tpu.memory_space<semaphore_mem>> -> memref<!tpu.dma_semaphore, #tpu.memory_space<semaphore_mem>>
      tpu.enqueue_dma source(%134 : memref<1x128xf32, #tpu.memory_space<any>>) target(%136 : memref<1x128xf32, #tpu.memory_space<vmem>>) target_semaphore(%138 : memref<!tpu.dma_semaphore, #tpu.memory_space<semaphore_mem>>)
      %c8_i32_94 = arith.constant 8 : i32
      %139 = arith.muli %83, %c8_i32_94 : i32
      %c6_i32_95 = arith.constant 6 : i32
      %140 = arith.addi %139, %c6_i32_95 : i32
      %141 = arith.index_cast %140 : i32 to index
      %142 = memref.load %arg1[%141] : memref<8xi32, #tpu.memory_space<smem>>
      %c6_i32_96 = arith.constant 6 : i32
      %c0_i32_97 = arith.constant 0 : i32
      %143 = tpu.memref_slice %arg3[%142, %c0_i32_97] : memref<96x128xf32, #tpu.memory_space<any>> -> memref<1x128xf32, #tpu.memory_space<any>>
      %c6_i32_98 = arith.constant 6 : i32
      %c0_i32_99 = arith.constant 0 : i32
      %144 = tpu.memref_slice %arg6[%84, %c6_i32_98, %c0_i32_99] : memref<2x8x128xf32, #tpu.memory_space<vmem>> -> memref<1x1x128xf32, #tpu.memory_space<vmem>>
      %145 = tpu.memref_squeeze %144 : memref<1x1x128xf32, #tpu.memory_space<vmem>> -> memref<1x128xf32, #tpu.memory_space<vmem>>
      %146 = tpu.memref_slice %arg7[%84, %c6_i32_96] : memref<2x8x!tpu.dma_semaphore, #tpu.memory_space<semaphore_mem>> -> memref<1x1x!tpu.dma_semaphore, #tpu.memory_space<semaphore_mem>>
      %147 = tpu.memref_squeeze %146 : memref<1x1x!tpu.dma_semaphore, #tpu.memory_space<semaphore_mem>> -> memref<!tpu.dma_semaphore, #tpu.memory_space<semaphore_mem>>
      tpu.enqueue_dma source(%143 : memref<1x128xf32, #tpu.memory_space<any>>) target(%145 : memref<1x128xf32, #tpu.memory_space<vmem>>) target_semaphore(%147 : memref<!tpu.dma_semaphore, #tpu.memory_space<semaphore_mem>>)
      %c8_i32_100 = arith.constant 8 : i32
      %148 = arith.muli %83, %c8_i32_100 : i32
      %c7_i32_101 = arith.constant 7 : i32
      %149 = arith.addi %148, %c7_i32_101 : i32
      %150 = arith.index_cast %149 : i32 to index
      %151 = memref.load %arg1[%150] : memref<8xi32, #tpu.memory_space<smem>>
      %c7_i32_102 = arith.constant 7 : i32
      %c0_i32_103 = arith.constant 0 : i32
      %152 = tpu.memref_slice %arg3[%151, %c0_i32_103] : memref<96x128xf32, #tpu.memory_space<any>> -> memref<1x128xf32, #tpu.memory_space<any>>
      %c7_i32_104 = arith.constant 7 : i32
      %c0_i32_105 = arith.constant 0 : i32
      %153 = tpu.memref_slice %arg6[%84, %c7_i32_104, %c0_i32_105] : memref<2x8x128xf32, #tpu.memory_space<vmem>> -> memref<1x1x128xf32, #tpu.memory_space<vmem>>
      %154 = tpu.memref_squeeze %153 : memref<1x1x128xf32, #tpu.memory_space<vmem>> -> memref<1x128xf32, #tpu.memory_space<vmem>>
      %155 = tpu.memref_slice %arg7[%84, %c7_i32_102] : memref<2x8x!tpu.dma_semaphore, #tpu.memory_space<semaphore_mem>> -> memref<1x1x!tpu.dma_semaphore, #tpu.memory_space<semaphore_mem>>
      %156 = tpu.memref_squeeze %155 : memref<1x1x!tpu.dma_semaphore, #tpu.memory_space<semaphore_mem>> -> memref<!tpu.dma_semaphore, #tpu.memory_space<semaphore_mem>>
      tpu.enqueue_dma source(%152 : memref<1x128xf32, #tpu.memory_space<any>>) target(%154 : memref<1x128xf32, #tpu.memory_space<vmem>>) target_semaphore(%156 : memref<!tpu.dma_semaphore, #tpu.memory_space<semaphore_mem>>)
    } else {
    }
    %c0_i32_8 = arith.constant 0 : i32
    %c0_i32_9 = arith.constant 0 : i32
    %c0_i32_10 = arith.constant 0 : i32
    %17 = tpu.memref_slice %arg3[%c0_i32_9, %c0_i32_10] : memref<96x128xf32, #tpu.memory_space<any>> -> memref<1x128xf32, #tpu.memory_space<any>>
    %c0_i32_11 = arith.constant 0 : i32
    %c0_i32_12 = arith.constant 0 : i32
    %18 = tpu.memref_slice %arg6[%9, %c0_i32_11, %c0_i32_12] : memref<2x8x128xf32, #tpu.memory_space<vmem>> -> memref<1x1x128xf32, #tpu.memory_space<vmem>>
    %19 = tpu.memref_squeeze %18 : memref<1x1x128xf32, #tpu.memory_space<vmem>> -> memref<1x128xf32, #tpu.memory_space<vmem>>
    %20 = tpu.memref_slice %arg7[%9, %c0_i32_8] : memref<2x8x!tpu.dma_semaphore, #tpu.memory_space<semaphore_mem>> -> memref<1x1x!tpu.dma_semaphore, #tpu.memory_space<semaphore_mem>>
    %21 = tpu.memref_squeeze %20 : memref<1x1x!tpu.dma_semaphore, #tpu.memory_space<semaphore_mem>> -> memref<!tpu.dma_semaphore, #tpu.memory_space<semaphore_mem>>
    tpu.wait_dma2 semaphore(%21 : memref<!tpu.dma_semaphore, #tpu.memory_space<semaphore_mem>>) src(%17 : memref<1x128xf32, #tpu.memory_space<any>>) dst(%19 : memref<1x128xf32, #tpu.memory_space<vmem>>)
    %c1_i32_13 = arith.constant 1 : i32
    %c0_i32_14 = arith.constant 0 : i32
    %c0_i32_15 = arith.constant 0 : i32
    %22 = tpu.memref_slice %arg3[%c0_i32_14, %c0_i32_15] : memref<96x128xf32, #tpu.memory_space<any>> -> memref<1x128xf32, #tpu.memory_space<any>>
    %c1_i32_16 = arith.constant 1 : i32
    %c0_i32_17 = arith.constant 0 : i32
    %23 = tpu.memref_slice %arg6[%9, %c1_i32_16, %c0_i32_17] : memref<2x8x128xf32, #tpu.memory_space<vmem>> -> memref<1x1x128xf32, #tpu.memory_space<vmem>>
    %24 = tpu.memref_squeeze %23 : memref<1x1x128xf32, #tpu.memory_space<vmem>> -> memref<1x128xf32, #tpu.memory_space<vmem>>
    %25 = tpu.memref_slice %arg7[%9, %c1_i32_13] : memref<2x8x!tpu.dma_semaphore, #tpu.memory_space<semaphore_mem>> -> memref<1x1x!tpu.dma_semaphore, #tpu.memory_space<semaphore_mem>>
    %26 = tpu.memref_squeeze %25 : memref<1x1x!tpu.dma_semaphore, #tpu.memory_space<semaphore_mem>> -> memref<!tpu.dma_semaphore, #tpu.memory_space<semaphore_mem>>
    tpu.wait_dma2 semaphore(%26 : memref<!tpu.dma_semaphore, #tpu.memory_space<semaphore_mem>>) src(%22 : memref<1x128xf32, #tpu.memory_space<any>>) dst(%24 : memref<1x128xf32, #tpu.memory_space<vmem>>)
    %c2_i32_18 = arith.constant 2 : i32
    %c0_i32_19 = arith.constant 0 : i32
    %c0_i32_20 = arith.constant 0 : i32
    %27 = tpu.memref_slice %arg3[%c0_i32_19, %c0_i32_20] : memref<96x128xf32, #tpu.memory_space<any>> -> memref<1x128xf32, #tpu.memory_space<any>>
    %c2_i32_21 = arith.constant 2 : i32
    %c0_i32_22 = arith.constant 0 : i32
    %28 = tpu.memref_slice %arg6[%9, %c2_i32_21, %c0_i32_22] : memref<2x8x128xf32, #tpu.memory_space<vmem>> -> memref<1x1x128xf32, #tpu.memory_space<vmem>>
    %29 = tpu.memref_squeeze %28 : memref<1x1x128xf32, #tpu.memory_space<vmem>> -> memref<1x128xf32, #tpu.memory_space<vmem>>
    %30 = tpu.memref_slice %arg7[%9, %c2_i32_18] : memref<2x8x!tpu.dma_semaphore, #tpu.memory_space<semaphore_mem>> -> memref<1x1x!tpu.dma_semaphore, #tpu.memory_space<semaphore_mem>>
    %31 = tpu.memref_squeeze %30 : memref<1x1x!tpu.dma_semaphore, #tpu.memory_space<semaphore_mem>> -> memref<!tpu.dma_semaphore, #tpu.memory_space<semaphore_mem>>
    tpu.wait_dma2 semaphore(%31 : memref<!tpu.dma_semaphore, #tpu.memory_space<semaphore_mem>>) src(%27 : memref<1x128xf32, #tpu.memory_space<any>>) dst(%29 : memref<1x128xf32, #tpu.memory_space<vmem>>)
    %c3_i32 = arith.constant 3 : i32
    %c0_i32_23 = arith.constant 0 : i32
    %c0_i32_24 = arith.constant 0 : i32
    %32 = tpu.memref_slice %arg3[%c0_i32_23, %c0_i32_24] : memref<96x128xf32, #tpu.memory_space<any>> -> memref<1x128xf32, #tpu.memory_space<any>>
    %c3_i32_25 = arith.constant 3 : i32
    %c0_i32_26 = arith.constant 0 : i32
    %33 = tpu.memref_slice %arg6[%9, %c3_i32_25, %c0_i32_26] : memref<2x8x128xf32, #tpu.memory_space<vmem>> -> memref<1x1x128xf32, #tpu.memory_space<vmem>>
    %34 = tpu.memref_squeeze %33 : memref<1x1x128xf32, #tpu.memory_space<vmem>> -> memref<1x128xf32, #tpu.memory_space<vmem>>
    %35 = tpu.memref_slice %arg7[%9, %c3_i32] : memref<2x8x!tpu.dma_semaphore, #tpu.memory_space<semaphore_mem>> -> memref<1x1x!tpu.dma_semaphore, #tpu.memory_space<semaphore_mem>>
    %36 = tpu.memref_squeeze %35 : memref<1x1x!tpu.dma_semaphore, #tpu.memory_space<semaphore_mem>> -> memref<!tpu.dma_semaphore, #tpu.memory_space<semaphore_mem>>
    tpu.wait_dma2 semaphore(%36 : memref<!tpu.dma_semaphore, #tpu.memory_space<semaphore_mem>>) src(%32 : memref<1x128xf32, #tpu.memory_space<any>>) dst(%34 : memref<1x128xf32, #tpu.memory_space<vmem>>)
    %c4_i32 = arith.constant 4 : i32
    %c0_i32_27 = arith.constant 0 : i32
    %c0_i32_28 = arith.constant 0 : i32
    %37 = tpu.memref_slice %arg3[%c0_i32_27, %c0_i32_28] : memref<96x128xf32, #tpu.memory_space<any>> -> memref<1x128xf32, #tpu.memory_space<any>>
    %c4_i32_29 = arith.constant 4 : i32
    %c0_i32_30 = arith.constant 0 : i32
    %38 = tpu.memref_slice %arg6[%9, %c4_i32_29, %c0_i32_30] : memref<2x8x128xf32, #tpu.memory_space<vmem>> -> memref<1x1x128xf32, #tpu.memory_space<vmem>>
    %39 = tpu.memref_squeeze %38 : memref<1x1x128xf32, #tpu.memory_space<vmem>> -> memref<1x128xf32, #tpu.memory_space<vmem>>
    %40 = tpu.memref_slice %arg7[%9, %c4_i32] : memref<2x8x!tpu.dma_semaphore, #tpu.memory_space<semaphore_mem>> -> memref<1x1x!tpu.dma_semaphore, #tpu.memory_space<semaphore_mem>>
    %41 = tpu.memref_squeeze %40 : memref<1x1x!tpu.dma_semaphore, #tpu.memory_space<semaphore_mem>> -> memref<!tpu.dma_semaphore, #tpu.memory_space<semaphore_mem>>
    tpu.wait_dma2 semaphore(%41 : memref<!tpu.dma_semaphore, #tpu.memory_space<semaphore_mem>>) src(%37 : memref<1x128xf32, #tpu.memory_space<any>>) dst(%39 : memref<1x128xf32, #tpu.memory_space<vmem>>)
    %c5_i32 = arith.constant 5 : i32
    %c0_i32_31 = arith.constant 0 : i32
    %c0_i32_32 = arith.constant 0 : i32
    %42 = tpu.memref_slice %arg3[%c0_i32_31, %c0_i32_32] : memref<96x128xf32, #tpu.memory_space<any>> -> memref<1x128xf32, #tpu.memory_space<any>>
    %c5_i32_33 = arith.constant 5 : i32
    %c0_i32_34 = arith.constant 0 : i32
    %43 = tpu.memref_slice %arg6[%9, %c5_i32_33, %c0_i32_34] : memref<2x8x128xf32, #tpu.memory_space<vmem>> -> memref<1x1x128xf32, #tpu.memory_space<vmem>>
    %44 = tpu.memref_squeeze %43 : memref<1x1x128xf32, #tpu.memory_space<vmem>> -> memref<1x128xf32, #tpu.memory_space<vmem>>
    %45 = tpu.memref_slice %arg7[%9, %c5_i32] : memref<2x8x!tpu.dma_semaphore, #tpu.memory_space<semaphore_mem>> -> memref<1x1x!tpu.dma_semaphore, #tpu.memory_space<semaphore_mem>>
    %46 = tpu.memref_squeeze %45 : memref<1x1x!tpu.dma_semaphore, #tpu.memory_space<semaphore_mem>> -> memref<!tpu.dma_semaphore, #tpu.memory_space<semaphore_mem>>
    tpu.wait_dma2 semaphore(%46 : memref<!tpu.dma_semaphore, #tpu.memory_space<semaphore_mem>>) src(%42 : memref<1x128xf32, #tpu.memory_space<any>>) dst(%44 : memref<1x128xf32, #tpu.memory_space<vmem>>)
    %c6_i32 = arith.constant 6 : i32
    %c0_i32_35 = arith.constant 0 : i32
    %c0_i32_36 = arith.constant 0 : i32
    %47 = tpu.memref_slice %arg3[%c0_i32_35, %c0_i32_36] : memref<96x128xf32, #tpu.memory_space<any>> -> memref<1x128xf32, #tpu.memory_space<any>>
    %c6_i32_37 = arith.constant 6 : i32
    %c0_i32_38 = arith.constant 0 : i32
    %48 = tpu.memref_slice %arg6[%9, %c6_i32_37, %c0_i32_38] : memref<2x8x128xf32, #tpu.memory_space<vmem>> -> memref<1x1x128xf32, #tpu.memory_space<vmem>>
    %49 = tpu.memref_squeeze %48 : memref<1x1x128xf32, #tpu.memory_space<vmem>> -> memref<1x128xf32, #tpu.memory_space<vmem>>
    %50 = tpu.memref_slice %arg7[%9, %c6_i32] : memref<2x8x!tpu.dma_semaphore, #tpu.memory_space<semaphore_mem>> -> memref<1x1x!tpu.dma_semaphore, #tpu.memory_space<semaphore_mem>>
    %51 = tpu.memref_squeeze %50 : memref<1x1x!tpu.dma_semaphore, #tpu.memory_space<semaphore_mem>> -> memref<!tpu.dma_semaphore, #tpu.memory_space<semaphore_mem>>
    tpu.wait_dma2 semaphore(%51 : memref<!tpu.dma_semaphore, #tpu.memory_space<semaphore_mem>>) src(%47 : memref<1x128xf32, #tpu.memory_space<any>>) dst(%49 : memref<1x128xf32, #tpu.memory_space<vmem>>)
    %c7_i32 = arith.constant 7 : i32
    %c0_i32_39 = arith.constant 0 : i32
    %c0_i32_40 = arith.constant 0 : i32
    %52 = tpu.memref_slice %arg3[%c0_i32_39, %c0_i32_40] : memref<96x128xf32, #tpu.memory_space<any>> -> memref<1x128xf32, #tpu.memory_space<any>>
    %c7_i32_41 = arith.constant 7 : i32
    %c0_i32_42 = arith.constant 0 : i32
    %53 = tpu.memref_slice %arg6[%9, %c7_i32_41, %c0_i32_42] : memref<2x8x128xf32, #tpu.memory_space<vmem>> -> memref<1x1x128xf32, #tpu.memory_space<vmem>>
    %54 = tpu.memref_squeeze %53 : memref<1x1x128xf32, #tpu.memory_space<vmem>> -> memref<1x128xf32, #tpu.memory_space<vmem>>
    %55 = tpu.memref_slice %arg7[%9, %c7_i32] : memref<2x8x!tpu.dma_semaphore, #tpu.memory_space<semaphore_mem>> -> memref<1x1x!tpu.dma_semaphore, #tpu.memory_space<semaphore_mem>>
    %56 = tpu.memref_squeeze %55 : memref<1x1x!tpu.dma_semaphore, #tpu.memory_space<semaphore_mem>> -> memref<!tpu.dma_semaphore, #tpu.memory_space<semaphore_mem>>
    tpu.wait_dma2 semaphore(%56 : memref<!tpu.dma_semaphore, #tpu.memory_space<semaphore_mem>>) src(%52 : memref<1x128xf32, #tpu.memory_space<any>>) dst(%54 : memref<1x128xf32, #tpu.memory_space<vmem>>)
    %c0 = arith.constant 0 : index
    %c0_43 = arith.constant 0 : index
    %57 = vector.load %arg2[%c0, %c0_43] : memref<8x128xf32, #tpu.memory_space<vmem>>, vector<8x128xf32>
    %58 = arith.index_cast %9 : i32 to index
    %c0_44 = arith.constant 0 : index
    %c0_45 = arith.constant 0 : index
    %59 = vector.load %arg6[%58, %c0_44, %c0_45] : memref<2x8x128xf32, #tpu.memory_space<vmem>>, vector<1x8x128xf32>
    %60 = vector.shape_cast %59 : vector<1x8x128xf32> to vector<8x128xf32>
    %61 = arith.subf %57, %60 : vector<8x128xf32>
    %62 = arith.mulf %61, %61 : vector<8x128xf32>
    %cst = arith.constant dense<0.000000e+00> : vector<8xf32>
    %63 = vector.multi_reduction <add>, %62, %cst [1] : vector<8x128xf32> to vector<8xf32>
    %64 = vector.shape_cast %63 : vector<8xf32> to vector<8x1xf32>
    %cst_46 = arith.constant 9.99999996E-13 : f32
    %cst_47 = arith.constant 9.99999995E+11 : f32
    %65 = vector.broadcast %cst_46 : f32 to vector<8x1xf32>
    %66 = arith.maximumf %65, %64 : vector<8x1xf32>
    %67 = vector.broadcast %cst_47 : f32 to vector<8x1xf32>
    %68 = arith.minimumf %67, %66 : vector<8x1xf32>
    %c8_i32 = arith.constant 8 : i32
    %69 = arith.muli %arg0, %c8_i32 : i32
    %70 = tpu.iota {dimensions = array<i32: 0>} : vector<8x1xi32>
    %71 = vector.broadcast %69 : i32 to vector<8x1xi32>
    %72 = arith.addi %71, %70 : vector<8x1xi32>
    %c8_i32_48 = arith.constant 8 : i32
    %73 = vector.broadcast %c8_i32_48 : i32 to vector<8x1xi32>
    %74 = arith.cmpi slt, %72, %73 : vector<8x1xi32>
    %cst_49 = arith.constant 0.000000e+00 : f32
    %75 = vector.broadcast %cst_49 : f32 to vector<8x1xf32>
    %76 = arith.select %74, %68, %75 : vector<8x1xi1>, vector<8x1xf32>
    %c0_50 = arith.constant 0 : index
    %c0_51 = arith.constant 0 : index
    %77 = vector.load %arg5[%c0_50, %c0_51] : memref<8x1xf32, #tpu.memory_space<vmem>>, vector<8x1xf32>
    %78 = arith.addf %77, %76 : vector<8x1xf32>
    %c0_52 = arith.constant 0 : index
    %c0_53 = arith.constant 0 : index
    %79 = vector.load %arg5[%c0_52, %c0_53] : memref<8x1xf32, #tpu.memory_space<vmem>>, vector<8x1xf32>
    tpu.vector_store %arg5[%c0_52, %c0_53], %78 {strides = array<i32>} : memref<8x1xf32, #tpu.memory_space<vmem>>, vector<8x1xf32>,
    %c0_i32_54 = arith.constant 0 : i32
    %80 = arith.cmpi eq, %arg0, %c0_i32_54 : i32
    %81 = arith.extui %80 : i1 to i32
    %c0_i32_55 = arith.constant 0 : i32
    %82 = arith.cmpi ne, %81, %c0_i32_55 : i32
    scf.if %82 {
      %c0_56 = arith.constant 0 : index
      %c0_57 = arith.constant 0 : index
      %83 = vector.load %arg5[%c0_56, %c0_57] : memref<8x1xf32, #tpu.memory_space<vmem>>, vector<8x1xf32>
      %84 = vector.shape_cast %83 : vector<8x1xf32> to vector<1x8x1xf32>
      %cst_58 = arith.constant dense<0.000000e+00> : vector<1xf32>
      %85 = vector.multi_reduction <add>, %84, %cst_58 [1, 2] : vector<1x8x1xf32> to vector<1xf32>
      %86 = vector.shape_cast %85 : vector<1xf32> to vector<1x1x1xf32>
      %87 = vector.extract %86[0, 0, 0] : f32 from vector<1x1x1xf32>
      %cst_59 = arith.constant 8.000000e+00 : f32
      %88 = arith.divf %87, %cst_59 : f32
      %cst_60 = arith.constant 9.500000e-11 : f32
      %89 = arith.addf %88, %cst_60 : f32
      %c0_61 = arith.constant 0 : index
      %c0_62 = arith.constant 0 : index
      %90 = memref.load %arg4[%c0_61, %c0_62] : memref<1x1xf32, #tpu.memory_space<smem>>
      memref.store %89, %arg4[%c0_61, %c0_62] : memref<1x1xf32, #tpu.memory_space<smem>>
    } else {
    }
    return
  }
  func.func @transform_0(%arg0: i32, %arg1: memref<8xi32, #tpu.memory_space<smem>>) -> (i32, i32) {
    %c0_i32 = arith.constant 0 : i32
    %c0_i32_0 = arith.constant 0 : i32
    return %arg0, %c0_i32 : i32, i32
  }
  func.func @transform_2(%arg0: i32, %arg1: memref<8xi32, #tpu.memory_space<smem>>) -> (i32, i32) {
    %c0_i32 = arith.constant 0 : i32
    %c0_i32_0 = arith.constant 0 : i32
    %c0_i32_1 = arith.constant 0 : i32
    return %c0_i32, %c0_i32_0 : i32, i32
  }
}

</mosaic_0001>

<llo_original>
// kernel: tpu_custom_call.1
$region0: #{tpu_custom_call.1}
  #allocation0 [shape = 'u32[]', space=smem, size = 0x4, offset = 0x4, fixed_abs, tag = 'smem constant byte address 0x4 - core index']
  #allocation1 [shape = 'u32[144,128]{1,0:T(1,128)}', space=vmem, size = 0x12000, scoped, tag = 'internal scratch']
  #allocation2 [shape = 'f32[8,1]{1,0:T(8,128)}', space=vmem, size = 0x1000, scoped, tag = 'scratch operand']
  #allocation3 [shape = 'f32[2,8,128]{2,1,0:T(8,128)}', space=vmem, size = 0x2000, scoped, tag = 'scratch operand']
  #allocation4 [shape = 's32[16]{0}', space=sflag, size = 0x40, scoped, tag = 'scratch operand']
  #allocation5 [shape = 's32[1]{0}', space=sflag, size = 0x4, scoped, tag = 'scoped memory for tpu_custom_call.1']
  #allocation6 [shape = 'u8[512]{0}', space=smem, size = 0x200, scoped, tag = 'prefetched SMEM operand 0']
  #allocation11 [shape = 's32[]', space=sflag, size = 0x4, offset = 0, fixed_abs, tag = 'sflag constant byte address 0x0 - dummy sync flag']
  #allocation12 [shape = 's32[]', space=sflag, size = 0x4, offset = 0, fixed_abs, tag = 'sflag constant byte address 0x0 - dummy sync flag']
  #allocation13 [shape = 'u32[]', space=smem, size = 0x4, offset = 0x44, fixed_abs, tag = 'smem constant byte address 0x44 - assertion arg 0']
  #allocation14 [shape = 'u32[]', space=smem, size = 0x4, offset = 0x48, fixed_abs, tag = 'smem constant byte address 0x48 - assertion arg 1']
  #allocation15 [shape = 's32[]', space=sflag, size = 0x4, offset = 0, fixed_abs, tag = 'sflag constant byte address 0x0 - dummy sync flag']
  #allocation16 [shape = 's32[]', space=sflag, size = 0x4, offset = 0, fixed_abs, tag = 'sflag constant byte address 0x0 - dummy sync flag']
  #allocation17 [shape = 's32[]', space=sflag, size = 0x4, offset = 0, fixed_abs, tag = 'sflag constant byte address 0x0 - dummy sync flag']
  #allocation18 [shape = 's32[]', space=sflag, size = 0x4, offset = 0, fixed_abs, tag = 'sflag constant byte address 0x0 - dummy sync flag']
  #allocation19 [shape = 's32[]', space=sflag, size = 0x4, offset = 0, fixed_abs, tag = 'sflag constant byte address 0x0 - dummy sync flag']
  #allocation20 [shape = 's32[]', space=sflag, size = 0x4, offset = 0, fixed_abs, tag = 'sflag constant byte address 0x0 - dummy sync flag']
  #allocation21 [shape = 's32[]', space=sflag, size = 0x4, offset = 0, fixed_abs, tag = 'sflag constant byte address 0x0 - dummy sync flag']
  #allocation22 [shape = 's32[]', space=sflag, size = 0x4, offset = 0, fixed_abs, tag = 'sflag constant byte address 0x0 - dummy sync flag']
  #allocation23 [shape = 's32[]', space=sflag, size = 0x4, offset = 0, fixed_abs, tag = 'sflag constant byte address 0x0 - dummy sync flag']
  #allocation24 [shape = 's32[]', space=sflag, size = 0x4, offset = 0, fixed_abs, tag = 'sflag constant byte address 0x0 - dummy sync flag']
  #allocation25 [shape = 's32[]', space=sflag, size = 0x4, offset = 0, fixed_abs, tag = 'sflag constant byte address 0x0 - dummy sync flag']
  #allocation26 [shape = 's32[]', space=sflag, size = 0x4, offset = 0, fixed_abs, tag = 'sflag constant byte address 0x0 - dummy sync flag']
  #allocation27 [shape = 's32[]', space=sflag, size = 0x4, offset = 0, fixed_abs, tag = 'sflag constant byte address 0x0 - dummy sync flag']
  #allocation28 [shape = 's32[]', space=sflag, size = 0x4, offset = 0, fixed_abs, tag = 'sflag constant byte address 0x0 - dummy sync flag']
  #allocation29 [shape = 's32[]', space=sflag, size = 0x4, offset = 0, fixed_abs, tag = 'sflag constant byte address 0x0 - dummy sync flag']
  #allocation30 [shape = 's32[]', space=sflag, size = 0x4, offset = 0, fixed_abs, tag = 'sflag constant byte address 0x0 - dummy sync flag']
  #allocation31 [shape = 's32[]', space=sflag, size = 0x4, offset = 0, fixed_abs, tag = 'sflag constant byte address 0x0 - dummy sync flag']
  #allocation32 [shape = 's32[]', space=sflag, size = 0x4, offset = 0, fixed_abs, tag = 'sflag constant byte address 0x0 - dummy sync flag']
  #allocation33 [shape = 's32[]', space=sflag, size = 0x4, offset = 0, fixed_abs, tag = 'sflag constant byte address 0x0 - dummy sync flag']
  #allocation34 [shape = 's32[]', space=sflag, size = 0x4, offset = 0, fixed_abs, tag = 'sflag constant byte address 0x0 - dummy sync flag']
  #allocation35 [shape = 's32[]', space=sflag, size = 0x4, offset = 0, fixed_abs, tag = 'sflag constant byte address 0x0 - dummy sync flag']
  #allocation36 [shape = 's32[]', space=sflag, size = 0x4, offset = 0, fixed_abs, tag = 'sflag constant byte address 0x0 - dummy sync flag']
  #allocation37 [shape = 's32[]', space=sflag, size = 0x4, offset = 0, fixed_abs, tag = 'sflag constant byte address 0x0 - dummy sync flag']
  #allocation38 [shape = 's32[]', space=sflag, size = 0x4, offset = 0, fixed_abs, tag = 'sflag constant byte address 0x0 - dummy sync flag']
  #allocation39 [shape = 's32[]', space=sflag, size = 0x4, offset = 0, fixed_abs, tag = 'sflag constant byte address 0x0 - dummy sync flag']
  #allocation40 [shape = 's32[]', space=sflag, size = 0x4, offset = 0, fixed_abs, tag = 'sflag constant byte address 0x0 - dummy sync flag']
  #allocation41 [shape = 's32[]', space=sflag, size = 0x4, offset = 0, fixed_abs, tag = 'sflag constant byte address 0x0 - dummy sync flag']
  #allocation42 [shape = 's32[]', space=sflag, size = 0x4, offset = 0, fixed_abs, tag = 'sflag constant byte address 0x0 - dummy sync flag']
  #allocation43 [shape = 's32[]', space=sflag, size = 0x4, offset = 0, fixed_abs, tag = 'sflag constant byte address 0x0 - dummy sync flag']
  #allocation44 [shape = 's32[]', space=sflag, size = 0x4, offset = 0, fixed_abs, tag = 'sflag constant byte address 0x0 - dummy sync flag']
  %s0 = inlined_call_operand.hbm [shape: s32[8], index: 0, kind: input, shape index: {}]
  %s1 = inlined_call_operand.hbm [shape: f32[8,128], index: 1, kind: input, shape index: {}]
  %s2 = inlined_call_operand.hbm [shape: f32[96,128], index: 2, kind: input, shape index: {}]
  %s3 = inlined_call_operand.hbm [shape: f32[1,1], index: 3, kind: output, shape index: {}]
  %s4 = sld [smem:[#allocation0]]
  $region94: #{tpu_custom_call.1} parent=0
    _
  %s6 = ssub.s32 1, %s4
  %s7 = scalar_select 0, %s6, %s4
  %9 = dma.hbm_to_smem %s0, 16, [#allocation6], [#allocation5]
  %10 = dma.done [#allocation5], 16
  %11 = sfence
  $region1: #{tpu_custom_call.1} parent=0
    #allocation7 [shape = 'u8[4096]{0}', space=vmem, size = 0x1000, scoped, tag = 'input window, operand 1, single buffered']
    #allocation8 [shape = 's32[1]{0}', space=sflag, size = 0x4, scoped, tag = 'scoped memory for tpu_custom_call.1']
    #allocation9 [shape = 's32[1]{0}', space=sflag, size = 0x4, scoped, tag = 'scoped memory for tpu_custom_call.1']
    #allocation10 [shape = 'u8[512]{0}', space=smem, size = 0x200, scoped, tag = 'output window, operand 0, single buffered']
    %12 = vsyncpa [#allocation8], 0
    %13 = vsyncpa [#allocation9], 0
    // Predicated region
    $region2: #{tpu_custom_call.1} parent=1 // pred_check
      _
    $region3: #{tpu_custom_call.1} parent=1 // pred_check_branch
      %15 = sbr.rel (0) target = $region5
    $region4: #{tpu_custom_call.1} parent=1 // pred_region
      %s17 = ssub.s32 128, 128
      %18 = vsyncadd [#allocation8], %s17
      %s20 = sshll.u32 [#allocation7], 4
      %s21 = int_to_ptr.vmem [resolvable:$true] %s20
      %23 = dma.hbm_to_vmem [thread:$0]  %s1, 128, %s21, [#allocation8]
    $region5: #{tpu_custom_call.1} parent=1 // pred_fallthru
      _
    // Predicated region
    $region6: #{tpu_custom_call.1} parent=1 // pred_check
      _
    $region7: #{tpu_custom_call.1} parent=1 // pred_check_branch
      %25 = sbr.rel (0) target = $region9
    $region8: #{tpu_custom_call.1} parent=1 // pred_region
      %26 = dma.done [#allocation8], 128
    $region9: #{tpu_custom_call.1} parent=1 // pred_fallthru
      _
    %s27 = ssub.s32 0, 0
    %s28 = ssub.s32 0, 0
    %p29 = scmp.ne.s32.totalorder 0, 0
    %p30 = scmp.lt.s32.totalorder 0, 0
    %p31 = pnand %p30, %p29
    %p32 = pneg %p31
    %s33 = sadd.s32 0, 2
    %s34 = scalar_select %p32, %s33, 0
    %p35 = scmp.eq.s32.totalorder 0, 0
    // Predicated region
    $region10: #{tpu_custom_call.1} parent=1 // pred_check
      %p36 = pneg %p35
    $region11: #{tpu_custom_call.1} parent=1 // pred_check_branch
      %38 = sbr.rel (%p36) target = $region13
    $region12: #{tpu_custom_call.1} parent=1 // pred_region
      %vm39 = vcmask 7168
      %40 = vst.msk [vmem:[#allocation2] sm:$0xff] %vm39, 0.0
      %s41 = sld [smem:[#allocation6]]
      %s42 = smul.addr %s41, 16
      %s43 = scalar_lea.hbm %s2, %s42
      // Predicated region
      $region14: #{tpu_custom_call.1} parent=12 // pred_check
        _
      $region15: #{tpu_custom_call.1} parent=12 // pred_check_branch
        %45 = sbr.rel target = $region17
      $region16: #{tpu_custom_call.1} parent=12 // pred_region
        %46 = sst [smem:[#allocation13]] [#allocation12]
        %47 = sst [smem:[#allocation14]] [#allocation11]
      $region17: #{tpu_custom_call.1} parent=12 // pred_fallthru
        _
      %49 = shalt.err (0)
      %s51 = sshll.u32 [#allocation3], 4
      %s52 = int_to_ptr.vmem [resolvable:$true] %s51
      %54 = dma.hbm_to_vmem [thread:$0]  %s43, 16, %s52, [#allocation4]
      %s55 = sld [smem:[#allocation6 + $0x1]]
      %s56 = smul.addr %s55, 16
      %s57 = scalar_lea.hbm %s2, %s56
      %s58 = scalar_lea.vmem [#allocation3], 1
      %s59 = scalar_lea.sflag [#allocation4], 1
      // Predicated region
      $region18: #{tpu_custom_call.1} parent=12 // pred_check
        _
      $region19: #{tpu_custom_call.1} parent=12 // pred_check_branch
        %61 = sbr.rel target = $region21
      $region20: #{tpu_custom_call.1} parent=12 // pred_region
        %62 = sst [smem:[#allocation13]] [#allocation16]
        %63 = sst [smem:[#allocation14]] [#allocation15]
      $region21: #{tpu_custom_call.1} parent=12 // pred_fallthru
        _
      %65 = shalt.err (0)
      %s67 = sshll.u32 %s58, 4
      %s68 = int_to_ptr.vmem [resolvable:$true] %s67
      %70 = dma.hbm_to_vmem [thread:$0]  %s57, 16, %s68, %s59
      %s71 = sld [smem:[#allocation6 + $0x2]]
      %s72 = smul.addr %s71, 16
      %s73 = scalar_lea.hbm %s2, %s72
      %s74 = scalar_lea.vmem [#allocation3], 2
      %s75 = scalar_lea.sflag [#allocation4], 2
      // Predicated region
      $region22: #{tpu_custom_call.1} parent=12 // pred_check
        _
      $region23: #{tpu_custom_call.1} parent=12 // pred_check_branch
        %77 = sbr.rel target = $region25
      $region24: #{tpu_custom_call.1} parent=12 // pred_region
        %78 = sst [smem:[#allocation13]] [#allocation18]
        %79 = sst [smem:[#allocation14]] [#allocation17]
      $region25: #{tpu_custom_call.1} parent=12 // pred_fallthru
        _
      %81 = shalt.err (0)
      %s83 = sshll.u32 %s74, 4
      %s84 = int_to_ptr.vmem [resolvable:$true] %s83
      %86 = dma.hbm_to_vmem [thread:$0]  %s73, 16, %s84, %s75
      %s87 = sld [smem:[#allocation6 + $0x3]]
      %s88 = smul.addr %s87, 16
      %s89 = scalar_lea.hbm %s2, %s88
      %s90 = scalar_lea.vmem [#allocation3], 3
      %s91 = scalar_lea.sflag [#allocation4], 3
      // Predicated region
      $region26: #{tpu_custom_call.1} parent=12 // pred_check
        _
      $region27: #{tpu_custom_call.1} parent=12 // pred_check_branch
        %93 = sbr.rel target = $region29
      $region28: #{tpu_custom_call.1} parent=12 // pred_region
        %94 = sst [smem:[#allocation13]] [#allocation20]
        %95 = sst [smem:[#allocation14]] [#allocation19]
      $region29: #{tpu_custom_call.1} parent=12 // pred_fallthru
        _
      %97 = shalt.err (0)
      %s99 = sshll.u32 %s90, 4
      %s100 = int_to_ptr.vmem [resolvable:$true] %s99
      %102 = dma.hbm_to_vmem [thread:$0]  %s89, 16, %s100, %s91
      %s103 = sld [smem:[#allocation6 + $0x4]]
      %s104 = smul.addr %s103, 16
      %s105 = scalar_lea.hbm %s2, %s104
      %s106 = scalar_lea.vmem [#allocation3], 4
      %s107 = scalar_lea.sflag [#allocation4], 4
      // Predicated region
      $region30: #{tpu_custom_call.1} parent=12 // pred_check
        _
      $region31: #{tpu_custom_call.1} parent=12 // pred_check_branch
        %109 = sbr.rel target = $region33
      $region32: #{tpu_custom_call.1} parent=12 // pred_region
        %110 = sst [smem:[#allocation13]] [#allocation22]
        %111 = sst [smem:[#allocation14]] [#allocation21]
      $region33: #{tpu_custom_call.1} parent=12 // pred_fallthru
        _
      %113 = shalt.err (0)
      %s115 = sshll.u32 %s106, 4
      %s116 = int_to_ptr.vmem [resolvable:$true] %s115
      %118 = dma.hbm_to_vmem [thread:$0]  %s105, 16, %s116, %s107
      %s119 = sld [smem:[#allocation6 + $0x5]]
      %s120 = smul.addr %s119, 16
      %s121 = scalar_lea.hbm %s2, %s120
      %s122 = scalar_lea.vmem [#allocation3], 5
      %s123 = scalar_lea.sflag [#allocation4], 5
      // Predicated region
      $region34: #{tpu_custom_call.1} parent=12 // pred_check
        _
      $region35: #{tpu_custom_call.1} parent=12 // pred_check_branch
        %125 = sbr.rel target = $region37
      $region36: #{tpu_custom_call.1} parent=12 // pred_region
        %126 = sst [smem:[#allocation13]] [#allocation24]
        %127 = sst [smem:[#allocation14]] [#allocation23]
      $region37: #{tpu_custom_call.1} parent=12 // pred_fallthru
        _
      %129 = shalt.err (0)
      %s131 = sshll.u32 %s122, 4
      %s132 = int_to_ptr.vmem [resolvable:$true] %s131
      %134 = dma.hbm_to_vmem [thread:$0]  %s121, 16, %s132, %s123
      %s135 = sld [smem:[#allocation6 + $0x6]]
      %s136 = smul.addr %s135, 16
      %s137 = scalar_lea.hbm %s2, %s136
      %s138 = scalar_lea.vmem [#allocation3], 6
      %s139 = scalar_lea.sflag [#allocation4], 6
      // Predicated region
      $region38: #{tpu_custom_call.1} parent=12 // pred_check
        _
      $region39: #{tpu_custom_call.1} parent=12 // pred_check_branch
        %141 = sbr.rel target = $region41
      $region40: #{tpu_custom_call.1} parent=12 // pred_region
        %142 = sst [smem:[#allocation13]] [#allocation26]
        %143 = sst [smem:[#allocation14]] [#allocation25]
      $region41: #{tpu_custom_call.1} parent=12 // pred_fallthru
        _
      %145 = shalt.err (0)
      %s147 = sshll.u32 %s138, 4
      %s148 = int_to_ptr.vmem [resolvable:$true] %s147
      %150 = dma.hbm_to_vmem [thread:$0]  %s137, 16, %s148, %s139
      %s151 = sld [smem:[#allocation6 + $0x7]]
      %s152 = smul.addr %s151, 16
      %s153 = scalar_lea.hbm %s2, %s152
      %s154 = scalar_lea.vmem [#allocation3], 7
      %s155 = scalar_lea.sflag [#allocation4], 7
      // Predicated region
      $region42: #{tpu_custom_call.1} parent=12 // pred_check
        _
      $region43: #{tpu_custom_call.1} parent=12 // pred_check_branch
        %157 = sbr.rel target = $region45
      $region44: #{tpu_custom_call.1} parent=12 // pred_region
        %158 = sst [smem:[#allocation13]] [#allocation28]
        %159 = sst [smem:[#allocation14]] [#allocation27]
      $region45: #{tpu_custom_call.1} parent=12 // pred_fallthru
        _
      %161 = shalt.err (0)
      %s163 = sshll.u32 %s154, 4
      %s164 = int_to_ptr.vmem [resolvable:$true] %s163
      %166 = dma.hbm_to_vmem [thread:$0]  %s153, 16, %s164, %s155
    $region13: #{tpu_custom_call.1} parent=1 // pred_fallthru
      _
    %s167 = sadd.s32 0, 1
    %p168 = scmp.lt.s32.totalorder %s167, 1
    // Predicated region
    $region46: #{tpu_custom_call.1} parent=1 // pred_check
      %p169 = pneg %p168
    $region47: #{tpu_custom_call.1} parent=1 // pred_check_branch
      %171 = sbr.rel (%p169) target = $region49
    $region48: #{tpu_custom_call.1} parent=1 // pred_region
      %s172 = ssub.s32 1, %s34
      %s173 = smul.u32 %s167, 8
      %s174 = sld [smem:[#allocation6 + %s173]]
      %s175 = smul.addr %s174, 16
      %s176 = scalar_lea.hbm %s2, %s175
      %s177 = smul.u32 %s172, 8
      %s178 = scalar_lea.vmem [#allocation3], %s177
      %s179 = scalar_lea.sflag [#allocation4], %s177
      // Predicated region
      $region50: #{tpu_custom_call.1} parent=48 // pred_check
        _
      $region51: #{tpu_custom_call.1} parent=48 // pred_check_branch
        %181 = sbr.rel target = $region53
      $region52: #{tpu_custom_call.1} parent=48 // pred_region
        %182 = sst [smem:[#allocation13]] [#allocation30]
        %183 = sst [smem:[#allocation14]] [#allocation29]
      $region53: #{tpu_custom_call.1} parent=48 // pred_fallthru
        _
      %185 = shalt.err (0)
      %s187 = sshll.u32 %s178, 4
      %s188 = int_to_ptr.vmem [resolvable:$true] %s187
      %190 = dma.hbm_to_vmem [thread:$0]  %s176, 16, %s188, %s179
      %s191 = sadd.s32 %s173, 1
      %s192 = sld [smem:[#allocation6 + %s191]]
      %s193 = smul.addr %s192, 16
      %s194 = scalar_lea.hbm %s2, %s193
      %s195 = sadd.s32 1, %s177
      %s196 = scalar_lea.vmem [#allocation3], %s195
      %s197 = scalar_lea.sflag [#allocation4], %s195
      // Predicated region
      $region54: #{tpu_custom_call.1} parent=48 // pred_check
        _
      $region55: #{tpu_custom_call.1} parent=48 // pred_check_branch
        %199 = sbr.rel target = $region57
      $region56: #{tpu_custom_call.1} parent=48 // pred_region
        %200 = sst [smem:[#allocation13]] [#allocation32]
        %201 = sst [smem:[#allocation14]] [#allocation31]
      $region57: #{tpu_custom_call.1} parent=48 // pred_fallthru
        _
      %203 = shalt.err (0)
      %s205 = sshll.u32 %s196, 4
      %s206 = int_to_ptr.vmem [resolvable:$true] %s205
      %208 = dma.hbm_to_vmem [thread:$0]  %s194, 16, %s206, %s197
      %s209 = sadd.s32 %s173, 2
      %s210 = sld [smem:[#allocation6 + %s209]]
      %s211 = smul.addr %s210, 16
      %s212 = scalar_lea.hbm %s2, %s211
      %s213 = sadd.s32 2, %s177
      %s214 = scalar_lea.vmem [#allocation3], %s213
      %s215 = scalar_lea.sflag [#allocation4], %s213
      // Predicated region
      $region58: #{tpu_custom_call.1} parent=48 // pred_check
        _
      $region59: #{tpu_custom_call.1} parent=48 // pred_check_branch
        %217 = sbr.rel target = $region61
      $region60: #{tpu_custom_call.1} parent=48 // pred_region
        %218 = sst [smem:[#allocation13]] [#allocation34]
        %219 = sst [smem:[#allocation14]] [#allocation33]
      $region61: #{tpu_custom_call.1} parent=48 // pred_fallthru
        _
      %221 = shalt.err (0)
      %s223 = sshll.u32 %s214, 4
      %s224 = int_to_ptr.vmem [resolvable:$true] %s223
      %226 = dma.hbm_to_vmem [thread:$0]  %s212, 16, %s224, %s215
      %s227 = sadd.s32 %s173, 3
      %s228 = sld [smem:[#allocation6 + %s227]]
      %s229 = smul.addr %s228, 16
      %s230 = scalar_lea.hbm %s2, %s229
      %s231 = sadd.s32 3, %s177
      %s232 = scalar_lea.vmem [#allocation3], %s231
      %s233 = scalar_lea.sflag [#allocation4], %s231
      // Predicated region
      $region62: #{tpu_custom_call.1} parent=48 // pred_check
        _
      $region63: #{tpu_custom_call.1} parent=48 // pred_check_branch
        %235 = sbr.rel target = $region65
      $region64: #{tpu_custom_call.1} parent=48 // pred_region
        %236 = sst [smem:[#allocation13]] [#allocation36]
        %237 = sst [smem:[#allocation14]] [#allocation35]
      $region65: #{tpu_custom_call.1} parent=48 // pred_fallthru
        _
      %239 = shalt.err (0)
      %s241 = sshll.u32 %s232, 4
      %s242 = int_to_ptr.vmem [resolvable:$true] %s241
      %244 = dma.hbm_to_vmem [thread:$0]  %s230, 16, %s242, %s233
      %s245 = sadd.s32 %s173, 4
      %s246 = sld [smem:[#allocation6 + %s245]]
      %s247 = smul.addr %s246, 16
      %s248 = scalar_lea.hbm %s2, %s247
      %s249 = sadd.s32 4, %s177
      %s250 = scalar_lea.vmem [#allocation3], %s249
      %s251 = scalar_lea.sflag [#allocation4], %s249
      // Predicated region
      $region66: #{tpu_custom_call.1} parent=48 // pred_check
        _
      $region67: #{tpu_custom_call.1} parent=48 // pred_check_branch
        %253 = sbr.rel target = $region69
      $region68: #{tpu_custom_call.1} parent=48 // pred_region
        %254 = sst [smem:[#allocation13]] [#allocation38]
        %255 = sst [smem:[#allocation14]] [#allocation37]
      $region69: #{tpu_custom_call.1} parent=48 // pred_fallthru
        _
      %257 = shalt.err (0)
      %s259 = sshll.u32 %s250, 4
      %s260 = int_to_ptr.vmem [resolvable:$true] %s259
      %262 = dma.hbm_to_vmem [thread:$0]  %s248, 16, %s260, %s251
      %s263 = sadd.s32 %s173, 5
      %s264 = sld [smem:[#allocation6 + %s263]]
      %s265 = smul.addr %s264, 16
      %s266 = scalar_lea.hbm %s2, %s265
      %s267 = sadd.s32 5, %s177
      %s268 = scalar_lea.vmem [#allocation3], %s267
      %s269 = scalar_lea.sflag [#allocation4], %s267
      // Predicated region
      $region70: #{tpu_custom_call.1} parent=48 // pred_check
        _
      $region71: #{tpu_custom_call.1} parent=48 // pred_check_branch
        %271 = sbr.rel target = $region73
      $region72: #{tpu_custom_call.1} parent=48 // pred_region
        %272 = sst [smem:[#allocation13]] [#allocation40]
        %273 = sst [smem:[#allocation14]] [#allocation39]
      $region73: #{tpu_custom_call.1} parent=48 // pred_fallthru
        _
      %275 = shalt.err (0)
      %s277 = sshll.u32 %s268, 4
      %s278 = int_to_ptr.vmem [resolvable:$true] %s277
      %280 = dma.hbm_to_vmem [thread:$0]  %s266, 16, %s278, %s269
      %s281 = sadd.s32 %s173, 6
      %s282 = sld [smem:[#allocation6 + %s281]]
      %s283 = smul.addr %s282, 16
      %s284 = scalar_lea.hbm %s2, %s283
      %s285 = sadd.s32 6, %s177
      %s286 = scalar_lea.vmem [#allocation3], %s285
      %s287 = scalar_lea.sflag [#allocation4], %s285
      // Predicated region
      $region74: #{tpu_custom_call.1} parent=48 // pred_check
        _
      $region75: #{tpu_custom_call.1} parent=48 // pred_check_branch
        %289 = sbr.rel target = $region77
      $region76: #{tpu_custom_call.1} parent=48 // pred_region
        %290 = sst [smem:[#allocation13]] [#allocation42]
        %291 = sst [smem:[#allocation14]] [#allocation41]
      $region77: #{tpu_custom_call.1} parent=48 // pred_fallthru
        _
      %293 = shalt.err (0)
      %s295 = sshll.u32 %s286, 4
      %s296 = int_to_ptr.vmem [resolvable:$true] %s295
      %298 = dma.hbm_to_vmem [thread:$0]  %s284, 16, %s296, %s287
      %s299 = sadd.s32 %s173, 7
      %s300 = sld [smem:[#allocation6 + %s299]]
      %s301 = smul.addr %s300, 16
      %s302 = scalar_lea.hbm %s2, %s301
      %s303 = sadd.s32 7, %s177
      %s304 = scalar_lea.vmem [#allocation3], %s303
      %s305 = scalar_lea.sflag [#allocation4], %s303
      // Predicated region
      $region78: #{tpu_custom_call.1} parent=48 // pred_check
        _
      $region79: #{tpu_custom_call.1} parent=48 // pred_check_branch
        %307 = sbr.rel target = $region81
      $region80: #{tpu_custom_call.1} parent=48 // pred_region
        %308 = sst [smem:[#allocation13]] [#allocation44]
        %309 = sst [smem:[#allocation14]] [#allocation43]
      $region81: #{tpu_custom_call.1} parent=48 // pred_fallthru
        _
      %311 = shalt.err (0)
      %s313 = sshll.u32 %s304, 4
      %s314 = int_to_ptr.vmem [resolvable:$true] %s313
      %316 = dma.hbm_to_vmem [thread:$0]  %s302, 16, %s314, %s305
    $region49: #{tpu_custom_call.1} parent=1 // pred_fallthru
      _
    %s317 = smul.u32 %s34, 8
    %s318 = scalar_lea.sflag [#allocation4], %s317
    %s319 = smul.u32 1, 1
    %s320 = sshll.u32 %s319, 4
    %321 = dma.done %s318, %s320
    %s322 = sadd.s32 1, %s317
    %s323 = scalar_lea.sflag [#allocation4], %s322
    %s324 = sshll.u32 %s319, 4
    %325 = dma.done %s323, %s324
    %s326 = sadd.s32 2, %s317
    %s327 = scalar_lea.sflag [#allocation4], %s326
    %s328 = sshll.u32 %s319, 4
    %329 = dma.done %s327, %s328
    %s330 = sadd.s32 3, %s317
    %s331 = scalar_lea.sflag [#allocation4], %s330
    %s332 = sshll.u32 %s319, 4
    %333 = dma.done %s331, %s332
    %s334 = sadd.s32 4, %s317
    %s335 = scalar_lea.sflag [#allocation4], %s334
    %s336 = sshll.u32 %s319, 4
    %337 = dma.done %s335, %s336
    %s338 = sadd.s32 5, %s317
    %s339 = scalar_lea.sflag [#allocation4], %s338
    %s340 = sshll.u32 %s319, 4
    %341 = dma.done %s339, %s340
    %s342 = sadd.s32 6, %s317
    %s343 = scalar_lea.sflag [#allocation4], %s342
    %s344 = sshll.u32 %s319, 4
    %345 = dma.done %s343, %s344
    %s346 = sadd.s32 7, %s317
    %s347 = scalar_lea.sflag [#allocation4], %s346
    %s348 = sshll.u32 %s319, 4
    %349 = dma.done %s347, %s348
    %v350 = vld [vmem:[#allocation7] sm:$0xff]
    %s351 = scalar_lea.vmem [#allocation3], %s317
    %v352 = vld [vmem:[%s351] sm:$0xff]
    %v353 = vsub.f32 %v350, %v352
    %v354 = vmul.f32 %v353, %v353
    %355 = vadd.xlane.f32.xlu0 %v354
    %v356 = vpop.xlane.xlu0 %355
    %v357 = vmax.f32 %v356, 1e-12
    %v358 = vmin.f32 %v357, 1e+12
    %s359 = smul.u32 0, 8
    %v360 = vlaneseq
    %v361 = vshrl.u32 %v360, 7
    %v362 = vstv %s359
    %v363 = vadd.s32 %v362, %v361
    %vm364 = vcmp.lt.s32.totalorder %v363, 8
    %v365 = vsel %vm364, %v358, 0.0
    %v366 = vld [vmem:[#allocation2] sm:$0xff]
    %v367 = vadd.f32 %v366, %v365
    %vm368 = vcmask 7168
    %369 = vst.msk [vmem:[#allocation2] sm:$0xff] %vm368, %v367
    // Predicated region
    $region82: #{tpu_custom_call.1} parent=1 // pred_check
      %p370 = pneg %p35
    $region83: #{tpu_custom_call.1} parent=1 // pred_check_branch
      %372 = sbr.rel (%p370) target = $region85
    $region84: #{tpu_custom_call.1} parent=1 // pred_region
      %v373 = vld [vmem:[#allocation2] sm:$0xff]
      %v374 = vsel %vm368, %v373, 0.0
      %375 = vadd.xlane.f32.xlu0 %v374
      %v376 = vpop.xlane.xlu0 %375
      %v377 = vrot.slane %v376, 4
      %v378 = vadd.f32 %v376, %v377
      %v379 = vrot.slane %v378, 2
      %v380 = vadd.f32 %v378, %v379
      %v381 = vrot.slane %v380, 1
      %v382 = vadd.f32 %v380, %v381
      %s383 = vtos %v382
      %v384 = vrcp.pop 8.0
      %s385 = vtos %v384
      %s386 = smul.f32 %s383, %s385
      %s387 = sadd.f32 %s386, 9.5e-11
      %s388 = scalar_lea.smem [#allocation10], 0
      %389 = sst [smem:[%s388]] %s387
    $region85: #{tpu_custom_call.1} parent=1 // pred_fallthru
      _
    // Predicated region
    $region86: #{tpu_custom_call.1} parent=1 // pred_check
      _
    $region87: #{tpu_custom_call.1} parent=1 // pred_check_branch
      %391 = sbr.rel (0) target = $region89
    $region88: #{tpu_custom_call.1} parent=1 // pred_region
      %s393 = ssub.s32 16, 16
      %394 = vsyncadd [#allocation9], %s393
      %397 = dma.smem_to_hbm [#allocation10], 16, %s3, [#allocation9]
    $region89: #{tpu_custom_call.1} parent=1 // pred_fallthru
      _
    // Predicated region
    $region90: #{tpu_custom_call.1} parent=1 // pred_check
      _
    $region91: #{tpu_custom_call.1} parent=1 // pred_check_branch
      %399 = sbr.rel (0) target = $region93
    $region92: #{tpu_custom_call.1} parent=1 // pred_region
      %400 = dma.done [#allocation9], 16
    $region93: #{tpu_custom_call.1} parent=1 // pred_fallthru
      _
    %401 = sfence
    %402 = vsyncpa [#allocation8], 1
    %403 = vsyncpa [#allocation9], 1
  %404 = vsyncmov [#allocation4]
  %s405 = vpop.sfrf %404
  %p406 = scmp.eq.s32.totalorder %s405, 0
  %p407 = pneg %p406
  %409 = shalt.err (%p407)
  %s410 = scalar_lea.sflag [#allocation4], 1
  %411 = vsyncmov %s410
  %s412 = vpop.sfrf %411
  %p413 = scmp.eq.s32.totalorder %s412, 0
  %p414 = pneg %p413
  %416 = shalt.err (%p414)
  %s417 = scalar_lea.sflag [#allocation4], 2
  %418 = vsyncmov %s417
  %s419 = vpop.sfrf %418
  %p420 = scmp.eq.s32.totalorder %s419, 0
  %p421 = pneg %p420
  %423 = shalt.err (%p421)
  %s424 = scalar_lea.sflag [#allocation4], 3
  %425 = vsyncmov %s424
  %s426 = vpop.sfrf %425
  %p427 = scmp.eq.s32.totalorder %s426, 0
  %p428 = pneg %p427
  %430 = shalt.err (%p428)
  %s431 = scalar_lea.sflag [#allocation4], 4
  %432 = vsyncmov %s431
  %s433 = vpop.sfrf %432
  %p434 = scmp.eq.s32.totalorder %s433, 0
  %p435 = pneg %p434
  %437 = shalt.err (%p435)
  %s438 = scalar_lea.sflag [#allocation4], 5
  %439 = vsyncmov %s438
  %s440 = vpop.sfrf %439
  %p441 = scmp.eq.s32.totalorder %s440, 0
  %p442 = pneg %p441
  %444 = shalt.err (%p442)
  %s445 = scalar_lea.sflag [#allocation4], 6
  %446 = vsyncmov %s445
  %s447 = vpop.sfrf %446
  %p448 = scmp.eq.s32.totalorder %s447, 0
  %p449 = pneg %p448
  %451 = shalt.err (%p449)
  %s452 = scalar_lea.sflag [#allocation4], 7
  %453 = vsyncmov %s452
  %s454 = vpop.sfrf %453
  %p455 = scmp.eq.s32.totalorder %s454, 0
  %p456 = pneg %p455
  %458 = shalt.err (%p456)
  %s459 = scalar_lea.sflag [#allocation4], 8
  %460 = vsyncmov %s459
  %s461 = vpop.sfrf %460
  %p462 = scmp.eq.s32.totalorder %s461, 0
  %p463 = pneg %p462
  %465 = shalt.err (%p463)
  %s466 = scalar_lea.sflag [#allocation4], 9
  %467 = vsyncmov %s466
  %s468 = vpop.sfrf %467
  %p469 = scmp.eq.s32.totalorder %s468, 0
  %p470 = pneg %p469
  %472 = shalt.err (%p470)
  %s473 = scalar_lea.sflag [#allocation4], 10
  %474 = vsyncmov %s473
  %s475 = vpop.sfrf %474
  %p476 = scmp.eq.s32.totalorder %s475, 0
  %p477 = pneg %p476
  %479 = shalt.err (%p477)
  %s480 = scalar_lea.sflag [#allocation4], 11
  %481 = vsyncmov %s480
  %s482 = vpop.sfrf %481
  %p483 = scmp.eq.s32.totalorder %s482, 0
  %p484 = pneg %p483
  %486 = shalt.err (%p484)
  %s487 = scalar_lea.sflag [#allocation4], 12
  %488 = vsyncmov %s487
  %s489 = vpop.sfrf %488
  %p490 = scmp.eq.s32.totalorder %s489, 0
  %p491 = pneg %p490
  %493 = shalt.err (%p491)
  %s494 = scalar_lea.sflag [#allocation4], 13
  %495 = vsyncmov %s494
  %s496 = vpop.sfrf %495
  %p497 = scmp.eq.s32.totalorder %s496, 0
  %p498 = pneg %p497
  %500 = shalt.err (%p498)
  %s501 = scalar_lea.sflag [#allocation4], 14
  %502 = vsyncmov %s501
  %s503 = vpop.sfrf %502
  %p504 = scmp.eq.s32.totalorder %s503, 0
  %p505 = pneg %p504
  %507 = shalt.err (%p505)
  %s508 = scalar_lea.sflag [#allocation4], 15
  %509 = vsyncmov %s508
  %s510 = vpop.sfrf %509
  %p511 = scmp.eq.s32.totalorder %s510, 0
  %p512 = pneg %p511
  %514 = shalt.err (%p512)

</llo_original>
